<compile_context>
chip_gen: v5e
topology: v5e:2x2
jax: 0.10.0
libtpu: 0.0.40
codegen_flags: <defaults>
</compile_context>

<pallas_src>
import jax
import jax.numpy as jnp
from jax.experimental import pallas as pl
from jax.experimental.pallas import tpu as pltpu


def _sqrt_kernel(x_ref, o_ref):
    # Elementwise sqrt on the whole VMEM tile (VPU/EUP path).
    o_ref[...] = jnp.sqrt(x_ref[...])


_LANE_CANDIDATES = (4096, 2048, 1024, 512, 256, 128)
# 2 MiB per block -> 4 double-buffered copies = 8 MiB, fits v5e's 16 MiB
# scoped-VMEM default and leaves headroom on v6e/v7x.
_TARGET_BLOCK_BYTES = 2 * 1024 * 1024


def _sublane_multiple(dtype) -> int:
    # Native packed tile height: 8 for f32, 16 for bf16/f16, 32 for 8-bit.
    itemsize = jnp.dtype(dtype).itemsize
    return max(8, 32 // itemsize)


def _run_sqrt_2d(x2d: jax.Array, block_rows: int, lanes: int) -> jax.Array:
    rows = x2d.shape[0]
    grid = (pl.cdiv(rows, block_rows),)
    return pl.pallas_call(
        _sqrt_kernel,
        out_shape=jax.ShapeDtypeStruct((rows, lanes), x2d.dtype),
        grid_spec=pltpu.PrefetchScalarGridSpec(
            num_scalar_prefetch=0,
            grid=grid,
            in_specs=[pl.BlockSpec((block_rows, lanes), lambda i: (i, 0))],
            out_specs=pl.BlockSpec((block_rows, lanes), lambda i: (i, 0)),
        ),
        compiler_params=pltpu.CompilerParams(
            dimension_semantics=("parallel",),
        ),
    )(x2d)


def pallas_sqrt(x: jax.Array) -> jax.Array:
    """Elementwise sqrt matching torch.sqrt semantics (NaN for x < 0)."""
    orig_shape = x.shape

    # torch.sqrt promotes integer inputs to floating point.
    if not jnp.issubdtype(x.dtype, jnp.floating):
        x = x.astype(jnp.float32)

    dtype = x.dtype
    itemsize = jnp.dtype(dtype).itemsize
    sub = _sublane_multiple(dtype)

    n = x.size
    if n == 0:
        return jnp.reshape(x, orig_shape)

    x_flat = jnp.ravel(x)  # free for a contiguous array

    # Pick the widest lane dim that divides n -> no padding copy needed.
    lanes = next((L for L in _LANE_CANDIDATES if n % L == 0), None)

    padded = False
    if lanes is None:
        # Ragged element count (not a multiple of 128): pad the flat view.
        lanes = 128
        tile = sub * lanes
        n_pad = pl.cdiv(n, tile) * tile
        x_flat = jnp.pad(x_flat, (0, n_pad - n))
        padded = True

    rows = x_flat.size // lanes
    x2d = x_flat.reshape(rows, lanes)

    # Block rows: as large as possible up to ~_TARGET_BLOCK_BYTES, rounded to
    # the packed sublane multiple; the full row extent is always legal.
    max_rows = max(sub, (_TARGET_BLOCK_BYTES // (lanes * itemsize)) // sub * sub)
    if rows <= max_rows:
        block_rows = rows
    else:
        block_rows = max_rows
        for cand in range(max_rows, sub - 1, -sub):
            if rows % cand == 0:
                block_rows = cand  # prefer a block that divides rows evenly
                break
        # (otherwise the ragged last block is handled by Pallas write masking)

    out2d = _run_sqrt_2d(x2d, block_rows, lanes)

    out_flat = out2d.reshape(-1)
    if padded:
        out_flat = out_flat[:n]
    return out_flat.reshape(orig_shape)


if __name__ == "__main__":
    key = jax.random.PRNGKey(0)

    # Small NCHW input consistent with an image-like tensor.
    x = jax.random.uniform(
        key, (2, 4, 16, 16), dtype=jnp.float32, minval=0.0, maxval=4.0
    )
    y = pallas_sqrt(x)
    jax.block_until_ready(y)
    y_ref = jnp.sqrt(x)
    assert y.shape == x.shape and y.dtype == y_ref.dtype
    assert jnp.allclose(y, y_ref, atol=1e-6, rtol=1e-6)

    # Secondary check: element count not a multiple of 128 (padded fallback).
    x2 = jax.random.uniform(
        jax.random.PRNGKey(1), (3, 5, 7), dtype=jnp.float32, minval=0.0, maxval=9.0
    )
    y2 = pallas_sqrt(x2)
    jax.block_until_ready(y2)
    assert jnp.allclose(y2, jnp.sqrt(x2), atol=1e-6, rtol=1e-6)

    print("KERNEL_OK")
</pallas_src>

<mosaic_0001>
module attributes {stable_mosaic.version = 11 : i64} {
  func.func @_sqrt_kernel(%arg0: i32, %arg1: memref<1x2048xf32, #tpu.memory_space<vmem>>, %arg2: memref<1x2048xf32, #tpu.memory_space<vmem>>) attributes {dimension_semantics = [#tpu.dimension_semantics<parallel>], iteration_bounds = array<i64: 1>, scalar_prefetch = 0 : i64, scratch_operands = 0 : i64, tpu.core_type = #tpu.core_type<tc>, window_params = [{transform_indices = @transform_0, window_bounds = array<i64: 1, 2048>}, {transform_indices = @transform_1, window_bounds = array<i64: 1, 2048>}]} {
    %c0 = arith.constant 0 : index
    %c0_0 = arith.constant 0 : index
    %0 = vector.load %arg1[%c0, %c0_0] : memref<1x2048xf32, #tpu.memory_space<vmem>>, vector<1x2048xf32>
    %1 = math.sqrt %0 : vector<1x2048xf32>
    %c0_1 = arith.constant 0 : index
    %c0_2 = arith.constant 0 : index
    %2 = vector.load %arg2[%c0_1, %c0_2] : memref<1x2048xf32, #tpu.memory_space<vmem>>, vector<1x2048xf32>
    tpu.vector_store %arg2[%c0_1, %c0_2], %1 {strides = array<i32>} : memref<1x2048xf32, #tpu.memory_space<vmem>>, vector<1x2048xf32>,
    return
  }
  func.func @transform_0(%arg0: i32) -> (i32, i32) {
    %c0_i32 = arith.constant 0 : i32
    %c0_i32_0 = arith.constant 0 : i32
    return %arg0, %c0_i32 : i32, i32
  }
  func.func @transform_1(%arg0: i32) -> (i32, i32) {
    %c0_i32 = arith.constant 0 : i32
    %c0_i32_0 = arith.constant 0 : i32
    return %arg0, %c0_i32 : i32, i32
  }
}

</mosaic_0001>

<llo_original>
// kernel: tpu_custom_call.1
$region0: #{tpu_custom_call.1}
  #allocation0 [shape = 'u32[]', space=smem, size = 0x4, offset = 0x4, fixed_abs, tag = 'smem constant byte address 0x4 - core index']
  #allocation1 [shape = 'u32[72,128]{1,0:T(1,128)}', space=vmem, size = 0x9000, scoped, tag = 'internal scratch']
  %s0 = inlined_call_operand.hbm [shape: f32[1,2048], index: 0, kind: input, shape index: {}]
  %s1 = inlined_call_operand.hbm [shape: f32[1,2048], index: 1, kind: output, shape index: {}]
  %s2 = sld [smem:[#allocation0]]
  $region18: #{tpu_custom_call.1} parent=0
    _
  %s4 = ssub.s32 1, %s2
  %s5 = scalar_select 0, %s4, %s2
  $region1: #{tpu_custom_call.1} parent=0
    #allocation2 [shape = 'u8[8192]{0}', space=vmem, size = 0x2000, scoped, tag = 'input window, operand 0, single buffered']
    #allocation3 [shape = 's32[1]{0}', space=sflag, size = 0x4, scoped, tag = 'scoped memory for tpu_custom_call.1']
    #allocation4 [shape = 's32[1]{0}', space=sflag, size = 0x4, scoped, tag = 'scoped memory for tpu_custom_call.1']
    #allocation5 [shape = 'u8[8192]{0}', space=vmem, size = 0x2000, scoped, tag = 'output window, operand 0, single buffered']
    %6 = vsyncpa [#allocation3], 0
    %7 = vsyncpa [#allocation4], 0
    // Predicated region
    $region2: #{tpu_custom_call.1} parent=1 // pred_check
      _
    $region3: #{tpu_custom_call.1} parent=1 // pred_check_branch
      %9 = sbr.rel (0) target = $region5
    $region4: #{tpu_custom_call.1} parent=1 // pred_region
      %11 = vsyncadd [#allocation3], 0
      %s13 = sshll.u32 %s0, 4
      %s14 = int_to_ptr.hbm [resolvable:$true] %s13
      %s15 = sshll.u32 [#allocation2], 4
      %s16 = int_to_ptr.vmem [resolvable:$true] %s15
      %18 = dma.hbm_to_vmem [thread:$0]  %s14, 256, %s16, [#allocation3]
    $region5: #{tpu_custom_call.1} parent=1 // pred_fallthru
      _
    // Predicated region
    $region6: #{tpu_custom_call.1} parent=1 // pred_check
      _
    $region7: #{tpu_custom_call.1} parent=1 // pred_check_branch
      %20 = sbr.rel (0) target = $region9
    $region8: #{tpu_custom_call.1} parent=1 // pred_region
      %22 = dma.done [#allocation3], 256
    $region9: #{tpu_custom_call.1} parent=1 // pred_fallthru
      _
    %v23 = vld [vmem:[#allocation2] sm:$0xff]
    %v24 = vld [vmem:[#allocation2 + $0x8] sm:$0xff]
    %v25 = vrsqrt.pop %v23
    %v26 = vmul.f32 %v25, %v23
    %v27 = vmul.f32 %v26, %v25
    %v28 = vmul.f32 0.5, %v27
    %v29 = vsub.f32 1.5, %v28
    %v30 = vmul.f32 %v25, %v29
    %v31 = vmul.f32 %v23, %v30
    %vm32 = vcmp.eq.f32.partialorder %v23, inf
    %v33 = vsel %vm32, %v23, %v31
    %vm34 = vcmp.eq.f32.partialorder %v23, 0.0
    %v35 = vand.u32 %v23, 2147483648
    %v36 = vsel %vm34, %v35, %v33
    %v37 = vrsqrt.pop %v24
    %v38 = vmul.f32 %v37, %v24
    %v39 = vmul.f32 %v38, %v37
    %v40 = vmul.f32 0.5, %v39
    %v41 = vsub.f32 1.5, %v40
    %v42 = vmul.f32 %v37, %v41
    %v43 = vmul.f32 %v24, %v42
    %vm44 = vcmp.eq.f32.partialorder %v24, inf
    %v45 = vsel %vm44, %v24, %v43
    %vm46 = vcmp.eq.f32.partialorder %v24, 0.0
    %v47 = vand.u32 %v24, 2147483648
    %v48 = vsel %vm46, %v47, %v45
    %49 = vst [vmem:[#allocation5] sm:$0xff] %v36
    %50 = vst [vmem:[#allocation5 + $0x8] sm:$0xff] %v48
    // Predicated region
    $region10: #{tpu_custom_call.1} parent=1 // pred_check
      _
    $region11: #{tpu_custom_call.1} parent=1 // pred_check_branch
      %52 = sbr.rel (0) target = $region13
    $region12: #{tpu_custom_call.1} parent=1 // pred_region
      %54 = vsyncadd [#allocation4], 0
      %s56 = sshll.u32 [#allocation5], 4
      %s57 = int_to_ptr.vmem [resolvable:$true] %s56
      %s58 = sshll.u32 %s1, 4
      %s59 = int_to_ptr.hbm [resolvable:$true] %s58
      %61 = dma.vmem_to_hbm [thread:$0]  %s57, 256, %s59, [#allocation4]
    $region13: #{tpu_custom_call.1} parent=1 // pred_fallthru
      _
    // Predicated region
    $region14: #{tpu_custom_call.1} parent=1 // pred_check
      _
    $region15: #{tpu_custom_call.1} parent=1 // pred_check_branch
      %63 = sbr.rel (0) target = $region17
    $region16: #{tpu_custom_call.1} parent=1 // pred_region
      %65 = dma.done [#allocation4], 256
    $region17: #{tpu_custom_call.1} parent=1 // pred_fallthru
      _
    %66 = vsyncpa [#allocation3], 1
    %67 = vsyncpa [#allocation4], 1

</llo_original>
